<compile_context>
chip_gen: v7x
topology: tpu7x:2x2x1
jax: 0.10.0
libtpu: 0.0.40
codegen_flags: <defaults>
</compile_context>

<pallas_src>
import functools

import numpy as np
import jax
import jax.numpy as jnp
from jax.experimental import pallas as pl
from jax.experimental.pallas import tpu as pltpu

_LANES = 128
_SUBLANES = 8
_NUM_SPLITS = 2          # outer "parallel" grid axis (2 TensorCores on v7x)
_VMEM_BUDGET = 12 << 20  # per-step working-set budget (safe on v5e/v6e/v7x)
_MAX_TILE_ROWS = 128     # 128 rows * 128 lanes = 16384 voxels per grid step


def _round_up(x, m):
    return ((x + m - 1) // m) * m


def _tversky_sums_kernel(pred_ref, lab_ref, tp_ref, ps_ref, ct_ref, *, mask_pad):
    # pred_ref : (N, C, Tr, 128)  logits tile (original dtype)
    # lab_ref  : (N, Tr, 128)     int32 labels (-1 marks spatial padding)
    # tp/ps/ct : (1, C, N, 8, 128) float32 partial-sum accumulators (resident)
    s = pl.program_id(1)

    @pl.when(s == 0)
    def _():
        tp_ref[...] = jnp.zeros_like(tp_ref)
        ps_ref[...] = jnp.zeros_like(ps_ref)
        ct_ref[...] = jnp.zeros_like(ct_ref)

    n, c_cls, t_rows, _ = pred_ref.shape

    logits = pred_ref[...].astype(jnp.float32)   # (N, C, Tr, 128)
    lbl = lab_ref[...]                           # (N, Tr, 128) int32

    # Numerically stable softmax over the class axis, done as elementwise ops
    # across per-class slabs (no cross-lane work).
    m = logits[:, 0]
    for c in range(1, c_cls):
        m = jnp.maximum(m, logits[:, c])
    e = [jnp.exp(logits[:, c] - m) for c in range(c_cls)]
    z = e[0]
    for c in range(1, c_cls):
        z = z + e[c]
    # One reciprocal per voxel instead of C divides (exact, keeps 1e-5 tol).
    z_inv = pl.reciprocal(z, approx=False)       # (N, Tr, 128)

    if mask_pad:
        valid = lbl >= 0                         # padded voxels excluded from psum

    def _rows_to_8(x):
        # (N, Tr, 128) -> (N, 8, 128) via aligned static slices (pure VPU adds).
        acc = x[:, 0:_SUBLANES, :]
        for r in range(1, t_rows // _SUBLANES):
            acc = acc + x[:, r * _SUBLANES:(r + 1) * _SUBLANES, :]
        return acc

    for c in range(c_cls):
        p_c = e[c] * z_inv                       # softmax prob of class c
        oh_c = lbl == c                          # one-hot slab (padding never matches)
        tp_c = jnp.where(oh_c, p_c, 0.0)
        if mask_pad:
            ps_c = jnp.where(valid, p_c, 0.0)
        else:
            ps_c = p_c
        ct_c = jnp.where(oh_c, 1.0, 0.0)
        tp_ref[0, c] = tp_ref[0, c] + _rows_to_8(tp_c)
        ps_ref[0, c] = ps_ref[0, c] + _rows_to_8(ps_c)
        ct_ref[0, c] = ct_ref[0, c] + _rows_to_8(ct_c)


def _tversky_sums(pred_ncs, lab_ns):
    """pred_ncs: (N, C, S) logits, lab_ns: (N, S) int32 labels.

    Returns per-(batch, class) TP, PSUM (sum of softmax probs) and COUNT
    (number of voxels of that class), each shaped (N, C) float32.
    """
    N, C, S = pred_ncs.shape

    # --- tile sizing -------------------------------------------------------
    R = -(-S // _LANES)                                    # spatial rows of 128
    rows_needed = max(_SUBLANES,
                      _round_up(-(-R // _NUM_SPLITS), _SUBLANES))

    itemsize = jnp.dtype(pred_ncs.dtype).itemsize
    # double-buffered pred + double-buffered labels, per row of 128 lanes
    per_row = _LANES * N * (2 * C * itemsize + 2 * 4)
    tile_rows = min(_MAX_TILE_ROWS, max(_SUBLANES, _VMEM_BUDGET // per_row))
    tile_rows = max(_SUBLANES, (tile_rows // _SUBLANES) * _SUBLANES)
    tile_rows = min(tile_rows, rows_needed)

    r_total = _round_up(R, _NUM_SPLITS * tile_rows)
    steps_per_split = r_total // (_NUM_SPLITS * tile_rows)
    s_total = r_total * _LANES
    pad = s_total - S

    # --- layout: pad + reshape to spatial-dense (rows, 128) ----------------
    if pad:
        pred_p = jnp.pad(pred_ncs, ((0, 0), (0, 0), (0, pad)))
        lab_p = jnp.pad(lab_ns, ((0, 0), (0, pad)), constant_values=-1)
    else:
        pred_p, lab_p = pred_ncs, lab_ns
    pred4 = pred_p.reshape(N, C, r_total, _LANES)
    lab3 = lab_p.reshape(N, r_total, _LANES)

    kernel = functools.partial(_tversky_sums_kernel, mask_pad=pad > 0)

    acc_shape = jax.ShapeDtypeStruct(
        (_NUM_SPLITS, C, N, _SUBLANES, _LANES), jnp.float32)
    acc_spec = pl.BlockSpec((1, C, N, _SUBLANES, _LANES),
                            lambda h, s: (h, 0, 0, 0, 0))

    tp_p, ps_p, ct_p = pl.pallas_call(
        kernel,
        out_shape=(acc_shape, acc_shape, acc_shape),
        grid=(_NUM_SPLITS, steps_per_split),
        in_specs=[
            pl.BlockSpec((N, C, tile_rows, _LANES),
                         lambda h, s: (0, 0, h * steps_per_split + s, 0)),
            pl.BlockSpec((N, tile_rows, _LANES),
                         lambda h, s: (0, h * steps_per_split + s, 0)),
        ],
        out_specs=(acc_spec, acc_spec, acc_spec),
        compiler_params=pltpu.CompilerParams(
            dimension_semantics=("parallel", "arbitrary"),
            vmem_limit_bytes=32 * 1024 * 1024,
        ),
    )(pred4, lab3)

    # tiny final reductions (splits, 8 sublanes, 128 lanes) + transpose to (N, C)
    tp = jnp.transpose(jnp.sum(tp_p, axis=(0, 3, 4)), (1, 0))
    ps = jnp.transpose(jnp.sum(ps_p, axis=(0, 3, 4)), (1, 0))
    ct = jnp.transpose(jnp.sum(ct_p, axis=(0, 3, 4)), (1, 0))
    return tp, ps, ct


def weighted_tversky_loss(y_pred, y_true, alpha=0.5, beta=0.5, smooth=1e-6,
                          class_weights=None):
    """Matches WeightedTverskyLoss.forward.

    y_pred: (N, C, D, H, W) float logits (any float dtype; streamed as-is)
    y_true: (N, 1, D, H, W) integer class labels
    """
    N, C = y_pred.shape[0], y_pred.shape[1]
    S = int(np.prod(y_pred.shape[2:]))
    pred = jnp.reshape(y_pred, (N, C, S))            # keep input dtype (bf16 ok)
    lab = jnp.reshape(y_true, (N, S)).astype(jnp.int32)

    tp, ps, ct = _tversky_sums(pred, lab)
    fp = ps - tp                                      # sum((1-onehot)*p)
    fn = ct - tp                                      # sum(onehot*(1-p))

    tversky = (tp + smooth) / (tp + alpha * fp + beta * fn + smooth)
    loss = 1.0 - tversky                              # (N, C)
    if class_weights is not None:
        loss = loss * jnp.asarray(class_weights, dtype=loss.dtype)
    return jnp.mean(loss)


def _reference_loss(y_pred, y_true, alpha=0.5, beta=0.5, smooth=1e-6,
                    class_weights=None):
    """Pure-JAX reference mirroring the PyTorch module, for a sanity check."""
    C = y_pred.shape[1]
    onehot = jax.nn.one_hot(jnp.squeeze(y_true, 1), C, dtype=jnp.float32)
    onehot = jnp.transpose(onehot, (0, 4, 1, 2, 3))   # (N, C, D, H, W)
    p = jax.nn.softmax(y_pred.astype(jnp.float32), axis=1)
    tp = jnp.sum(onehot * p, axis=(2, 3, 4))
    fp = jnp.sum((1.0 - onehot) * p, axis=(2, 3, 4))
    fn = jnp.sum(onehot * (1.0 - p), axis=(2, 3, 4))
    ti = (tp + smooth) / (tp + alpha * fp + beta * fn + smooth)
    loss = 1.0 - ti
    if class_weights is not None:
        loss = loss * jnp.asarray(class_weights, dtype=loss.dtype)
    return jnp.mean(loss)


if __name__ == "__main__":
    key = jax.random.PRNGKey(0)
    k1, k2 = jax.random.split(key)

    N, C, D, H, W = 2, 4, 4, 8, 16
    y_pred = jax.random.normal(k1, (N, C, D, H, W), dtype=jnp.float32)
    y_true = jax.random.randint(k2, (N, 1, D, H, W), 0, C, dtype=jnp.int32)

    # default module config (class_weights=None)
    loss = jax.block_until_ready(weighted_tversky_loss(y_pred, y_true))

    # also exercise the class_weights branch
    cw = [1.0, 2.0, 0.5, 1.5]
    loss_w = jax.block_until_ready(
        weighted_tversky_loss(y_pred, y_true, class_weights=cw))

    ref = _reference_loss(y_pred, y_true)
    ref_w = _reference_loss(y_pred, y_true, class_weights=cw)
    assert np.allclose(np.asarray(loss), np.asarray(ref), atol=1e-5), (loss, ref)
    assert np.allclose(np.asarray(loss_w), np.asarray(ref_w), atol=1e-5), (loss_w, ref_w)

    print("KERNEL_OK")
</pallas_src>

<mosaic_0001>
module attributes {stable_mosaic.version = 11 : i64} {
  func.func @_tversky_sums_kernel(%arg0: i32, %arg1: i32, %arg2: memref<2x4x8x128xf32, #tpu.memory_space<vmem>>, %arg3: memref<2x8x128xi32, #tpu.memory_space<vmem>>, %arg4: memref<1x4x2x8x128xf32, #tpu.memory_space<vmem>>, %arg5: memref<1x4x2x8x128xf32, #tpu.memory_space<vmem>>, %arg6: memref<1x4x2x8x128xf32, #tpu.memory_space<vmem>>) attributes {dimension_semantics = [#tpu.dimension_semantics<parallel>, #tpu.dimension_semantics<arbitrary>], iteration_bounds = array<i64: 2, 1>, scalar_prefetch = 0 : i64, scratch_operands = 0 : i64, tpu.core_type = #tpu.core_type<tc>, window_params = [{transform_indices = @transform_0, window_bounds = array<i64: 2, 4, 8, 128>}, {transform_indices = @transform_1, window_bounds = array<i64: 2, 8, 128>}, {transform_indices = @transform_2, window_bounds = array<i64: 1, 4, 2, 8, 128>}, {transform_indices = @transform_3, window_bounds = array<i64: 1, 4, 2, 8, 128>}, {transform_indices = @transform_4, window_bounds = array<i64: 1, 4, 2, 8, 128>}]} {
    %c0_i32 = arith.constant 0 : i32
    %0 = arith.cmpi eq, %arg1, %c0_i32 : i32
    %1 = arith.extui %0 : i1 to i32
    %c0_i32_0 = arith.constant 0 : i32
    %2 = arith.cmpi ne, %1, %c0_i32_0 : i32
    scf.if %2 {
      %cst_141 = arith.constant 0.000000e+00 : f32
      %150 = vector.broadcast %cst_141 : f32 to vector<1x4x2x8x128xf32>
      %c0_142 = arith.constant 0 : index
      %c0_143 = arith.constant 0 : index
      %c0_144 = arith.constant 0 : index
      %c0_145 = arith.constant 0 : index
      %c0_146 = arith.constant 0 : index
      %151 = vector.load %arg4[%c0_142, %c0_143, %c0_144, %c0_145, %c0_146] : memref<1x4x2x8x128xf32, #tpu.memory_space<vmem>>, vector<1x4x2x8x128xf32>
      tpu.vector_store %arg4[%c0_142, %c0_143, %c0_144, %c0_145, %c0_146], %150 {strides = array<i32>} : memref<1x4x2x8x128xf32, #tpu.memory_space<vmem>>, vector<1x4x2x8x128xf32>,
      %cst_147 = arith.constant 0.000000e+00 : f32
      %152 = vector.broadcast %cst_147 : f32 to vector<1x4x2x8x128xf32>
      %c0_148 = arith.constant 0 : index
      %c0_149 = arith.constant 0 : index
      %c0_150 = arith.constant 0 : index
      %c0_151 = arith.constant 0 : index
      %c0_152 = arith.constant 0 : index
      %153 = vector.load %arg5[%c0_148, %c0_149, %c0_150, %c0_151, %c0_152] : memref<1x4x2x8x128xf32, #tpu.memory_space<vmem>>, vector<1x4x2x8x128xf32>
      tpu.vector_store %arg5[%c0_148, %c0_149, %c0_150, %c0_151, %c0_152], %152 {strides = array<i32>} : memref<1x4x2x8x128xf32, #tpu.memory_space<vmem>>, vector<1x4x2x8x128xf32>,
      %cst_153 = arith.constant 0.000000e+00 : f32
      %154 = vector.broadcast %cst_153 : f32 to vector<1x4x2x8x128xf32>
      %c0_154 = arith.constant 0 : index
      %c0_155 = arith.constant 0 : index
      %c0_156 = arith.constant 0 : index
      %c0_157 = arith.constant 0 : index
      %c0_158 = arith.constant 0 : index
      %155 = vector.load %arg6[%c0_154, %c0_155, %c0_156, %c0_157, %c0_158] : memref<1x4x2x8x128xf32, #tpu.memory_space<vmem>>, vector<1x4x2x8x128xf32>
      tpu.vector_store %arg6[%c0_154, %c0_155, %c0_156, %c0_157, %c0_158], %154 {strides = array<i32>} : memref<1x4x2x8x128xf32, #tpu.memory_space<vmem>>, vector<1x4x2x8x128xf32>,
    } else {
    }
    %c0 = arith.constant 0 : index
    %c0_1 = arith.constant 0 : index
    %c0_2 = arith.constant 0 : index
    %c0_3 = arith.constant 0 : index
    %3 = vector.load %arg2[%c0, %c0_1, %c0_2, %c0_3] : memref<2x4x8x128xf32, #tpu.memory_space<vmem>>, vector<2x4x8x128xf32>
    %c0_4 = arith.constant 0 : index
    %c0_5 = arith.constant 0 : index
    %c0_6 = arith.constant 0 : index
    %4 = vector.load %arg3[%c0_4, %c0_5, %c0_6] : memref<2x8x128xi32, #tpu.memory_space<vmem>>, vector<2x8x128xi32>
    %5 = vector.extract_strided_slice %3 {offsets = [0, 0, 0, 0], sizes = [2, 1, 8, 128], strides = [1, 1, 1, 1]} : vector<2x4x8x128xf32> to vector<2x1x8x128xf32>
    %6 = vector.shape_cast %5 : vector<2x1x8x128xf32> to vector<2x8x128xf32>
    %7 = vector.extract_strided_slice %3 {offsets = [0, 1, 0, 0], sizes = [2, 1, 8, 128], strides = [1, 1, 1, 1]} : vector<2x4x8x128xf32> to vector<2x1x8x128xf32>
    %8 = vector.shape_cast %7 : vector<2x1x8x128xf32> to vector<2x8x128xf32>
    %9 = arith.maximumf %6, %8 : vector<2x8x128xf32>
    %10 = vector.extract_strided_slice %3 {offsets = [0, 2, 0, 0], sizes = [2, 1, 8, 128], strides = [1, 1, 1, 1]} : vector<2x4x8x128xf32> to vector<2x1x8x128xf32>
    %11 = vector.shape_cast %10 : vector<2x1x8x128xf32> to vector<2x8x128xf32>
    %12 = arith.maximumf %9, %11 : vector<2x8x128xf32>
    %13 = vector.extract_strided_slice %3 {offsets = [0, 3, 0, 0], sizes = [2, 1, 8, 128], strides = [1, 1, 1, 1]} : vector<2x4x8x128xf32> to vector<2x1x8x128xf32>
    %14 = vector.shape_cast %13 : vector<2x1x8x128xf32> to vector<2x8x128xf32>
    %15 = arith.maximumf %12, %14 : vector<2x8x128xf32>
    %16 = vector.extract_strided_slice %3 {offsets = [0, 0, 0, 0], sizes = [2, 1, 8, 128], strides = [1, 1, 1, 1]} : vector<2x4x8x128xf32> to vector<2x1x8x128xf32>
    %17 = vector.shape_cast %16 : vector<2x1x8x128xf32> to vector<2x8x128xf32>
    %18 = arith.subf %17, %15 : vector<2x8x128xf32>
    %19 = math.exp %18 : vector<2x8x128xf32>
    %20 = vector.extract_strided_slice %3 {offsets = [0, 1, 0, 0], sizes = [2, 1, 8, 128], strides = [1, 1, 1, 1]} : vector<2x4x8x128xf32> to vector<2x1x8x128xf32>
    %21 = vector.shape_cast %20 : vector<2x1x8x128xf32> to vector<2x8x128xf32>
    %22 = arith.subf %21, %15 : vector<2x8x128xf32>
    %23 = math.exp %22 : vector<2x8x128xf32>
    %24 = vector.extract_strided_slice %3 {offsets = [0, 2, 0, 0], sizes = [2, 1, 8, 128], strides = [1, 1, 1, 1]} : vector<2x4x8x128xf32> to vector<2x1x8x128xf32>
    %25 = vector.shape_cast %24 : vector<2x1x8x128xf32> to vector<2x8x128xf32>
    %26 = arith.subf %25, %15 : vector<2x8x128xf32>
    %27 = math.exp %26 : vector<2x8x128xf32>
    %28 = vector.extract_strided_slice %3 {offsets = [0, 3, 0, 0], sizes = [2, 1, 8, 128], strides = [1, 1, 1, 1]} : vector<2x4x8x128xf32> to vector<2x1x8x128xf32>
    %29 = vector.shape_cast %28 : vector<2x1x8x128xf32> to vector<2x8x128xf32>
    %30 = arith.subf %29, %15 : vector<2x8x128xf32>
    %31 = math.exp %30 : vector<2x8x128xf32>
    %32 = arith.addf %19, %23 : vector<2x8x128xf32>
    %33 = arith.addf %32, %27 : vector<2x8x128xf32>
    %34 = arith.addf %33, %31 : vector<2x8x128xf32>
    %35 = tpu.reciprocal %34 : vector<2x8x128xf32> -> vector<2x8x128xf32>
    %c0_i32_7 = arith.constant 0 : i32
    %36 = vector.broadcast %c0_i32_7 : i32 to vector<2x8x128xi32>
    %37 = arith.cmpi sge, %4, %36 : vector<2x8x128xi32>
    %38 = arith.mulf %19, %35 : vector<2x8x128xf32>
    %c0_i32_8 = arith.constant 0 : i32
    %39 = vector.broadcast %c0_i32_8 : i32 to vector<2x8x128xi32>
    %40 = arith.cmpi eq, %4, %39 : vector<2x8x128xi32>
    %cst = arith.constant 0.000000e+00 : f32
    %41 = vector.broadcast %cst : f32 to vector<2x8x128xf32>
    %42 = arith.select %40, %38, %41 : vector<2x8x128xi1>, vector<2x8x128xf32>
    %cst_9 = arith.constant 0.000000e+00 : f32
    %43 = vector.broadcast %cst_9 : f32 to vector<2x8x128xf32>
    %44 = arith.select %37, %38, %43 : vector<2x8x128xi1>, vector<2x8x128xf32>
    %cst_10 = arith.constant 1.000000e+00 : f32
    %cst_11 = arith.constant 0.000000e+00 : f32
    %45 = vector.broadcast %cst_10 : f32 to vector<2x8x128xf32>
    %46 = vector.broadcast %cst_11 : f32 to vector<2x8x128xf32>
    %47 = arith.select %40, %45, %46 : vector<2x8x128xi1>, vector<2x8x128xf32>
    %c0_12 = arith.constant 0 : index
    %c0_13 = arith.constant 0 : index
    %c0_14 = arith.constant 0 : index
    %c0_15 = arith.constant 0 : index
    %c0_16 = arith.constant 0 : index
    %48 = vector.load %arg4[%c0_12, %c0_13, %c0_14, %c0_15, %c0_16] : memref<1x4x2x8x128xf32, #tpu.memory_space<vmem>>, vector<1x1x2x8x128xf32>
    %49 = vector.shape_cast %48 : vector<1x1x2x8x128xf32> to vector<2x8x128xf32>
    %50 = arith.addf %49, %42 : vector<2x8x128xf32>
    %c0_17 = arith.constant 0 : index
    %c0_18 = arith.constant 0 : index
    %c0_19 = arith.constant 0 : index
    %c0_20 = arith.constant 0 : index
    %c0_21 = arith.constant 0 : index
    %51 = vector.load %arg4[%c0_17, %c0_18, %c0_19, %c0_20, %c0_21] : memref<1x4x2x8x128xf32, #tpu.memory_space<vmem>>, vector<1x1x2x8x128xf32>
    %52 = vector.shape_cast %51 : vector<1x1x2x8x128xf32> to vector<2x8x128xf32>
    %53 = vector.shape_cast %50 : vector<2x8x128xf32> to vector<1x1x2x8x128xf32>
    tpu.vector_store %arg4[%c0_17, %c0_18, %c0_19, %c0_20, %c0_21], %53 {strides = array<i32>} : memref<1x4x2x8x128xf32, #tpu.memory_space<vmem>>, vector<1x1x2x8x128xf32>,
    %c0_22 = arith.constant 0 : index
    %c0_23 = arith.constant 0 : index
    %c0_24 = arith.constant 0 : index
    %c0_25 = arith.constant 0 : index
    %c0_26 = arith.constant 0 : index
    %54 = vector.load %arg5[%c0_22, %c0_23, %c0_24, %c0_25, %c0_26] : memref<1x4x2x8x128xf32, #tpu.memory_space<vmem>>, vector<1x1x2x8x128xf32>
    %55 = vector.shape_cast %54 : vector<1x1x2x8x128xf32> to vector<2x8x128xf32>
    %56 = arith.addf %55, %44 : vector<2x8x128xf32>
    %c0_27 = arith.constant 0 : index
    %c0_28 = arith.constant 0 : index
    %c0_29 = arith.constant 0 : index
    %c0_30 = arith.constant 0 : index
    %c0_31 = arith.constant 0 : index
    %57 = vector.load %arg5[%c0_27, %c0_28, %c0_29, %c0_30, %c0_31] : memref<1x4x2x8x128xf32, #tpu.memory_space<vmem>>, vector<1x1x2x8x128xf32>
    %58 = vector.shape_cast %57 : vector<1x1x2x8x128xf32> to vector<2x8x128xf32>
    %59 = vector.shape_cast %56 : vector<2x8x128xf32> to vector<1x1x2x8x128xf32>
    tpu.vector_store %arg5[%c0_27, %c0_28, %c0_29, %c0_30, %c0_31], %59 {strides = array<i32>} : memref<1x4x2x8x128xf32, #tpu.memory_space<vmem>>, vector<1x1x2x8x128xf32>,
    %c0_32 = arith.constant 0 : index
    %c0_33 = arith.constant 0 : index
    %c0_34 = arith.constant 0 : index
    %c0_35 = arith.constant 0 : index
    %c0_36 = arith.constant 0 : index
    %60 = vector.load %arg6[%c0_32, %c0_33, %c0_34, %c0_35, %c0_36] : memref<1x4x2x8x128xf32, #tpu.memory_space<vmem>>, vector<1x1x2x8x128xf32>
    %61 = vector.shape_cast %60 : vector<1x1x2x8x128xf32> to vector<2x8x128xf32>
    %62 = arith.addf %61, %47 : vector<2x8x128xf32>
    %c0_37 = arith.constant 0 : index
    %c0_38 = arith.constant 0 : index
    %c0_39 = arith.constant 0 : index
    %c0_40 = arith.constant 0 : index
    %c0_41 = arith.constant 0 : index
    %63 = vector.load %arg6[%c0_37, %c0_38, %c0_39, %c0_40, %c0_41] : memref<1x4x2x8x128xf32, #tpu.memory_space<vmem>>, vector<1x1x2x8x128xf32>
    %64 = vector.shape_cast %63 : vector<1x1x2x8x128xf32> to vector<2x8x128xf32>
    %65 = vector.shape_cast %62 : vector<2x8x128xf32> to vector<1x1x2x8x128xf32>
    tpu.vector_store %arg6[%c0_37, %c0_38, %c0_39, %c0_40, %c0_41], %65 {strides = array<i32>} : memref<1x4x2x8x128xf32, #tpu.memory_space<vmem>>, vector<1x1x2x8x128xf32>,
    %66 = arith.mulf %23, %35 : vector<2x8x128xf32>
    %c1_i32 = arith.constant 1 : i32
    %67 = vector.broadcast %c1_i32 : i32 to vector<2x8x128xi32>
    %68 = arith.cmpi eq, %4, %67 : vector<2x8x128xi32>
    %cst_42 = arith.constant 0.000000e+00 : f32
    %69 = vector.broadcast %cst_42 : f32 to vector<2x8x128xf32>
    %70 = arith.select %68, %66, %69 : vector<2x8x128xi1>, vector<2x8x128xf32>
    %cst_43 = arith.constant 0.000000e+00 : f32
    %71 = vector.broadcast %cst_43 : f32 to vector<2x8x128xf32>
    %72 = arith.select %37, %66, %71 : vector<2x8x128xi1>, vector<2x8x128xf32>
    %cst_44 = arith.constant 1.000000e+00 : f32
    %cst_45 = arith.constant 0.000000e+00 : f32
    %73 = vector.broadcast %cst_44 : f32 to vector<2x8x128xf32>
    %74 = vector.broadcast %cst_45 : f32 to vector<2x8x128xf32>
    %75 = arith.select %68, %73, %74 : vector<2x8x128xi1>, vector<2x8x128xf32>
    %c0_46 = arith.constant 0 : index
    %c1 = arith.constant 1 : index
    %c0_47 = arith.constant 0 : index
    %c0_48 = arith.constant 0 : index
    %c0_49 = arith.constant 0 : index
    %76 = vector.load %arg4[%c0_46, %c1, %c0_47, %c0_48, %c0_49] : memref<1x4x2x8x128xf32, #tpu.memory_space<vmem>>, vector<1x1x2x8x128xf32>
    %77 = vector.shape_cast %76 : vector<1x1x2x8x128xf32> to vector<2x8x128xf32>
    %78 = arith.addf %77, %70 : vector<2x8x128xf32>
    %c0_50 = arith.constant 0 : index
    %c1_51 = arith.constant 1 : index
    %c0_52 = arith.constant 0 : index
    %c0_53 = arith.constant 0 : index
    %c0_54 = arith.constant 0 : index
    %79 = vector.load %arg4[%c0_50, %c1_51, %c0_52, %c0_53, %c0_54] : memref<1x4x2x8x128xf32, #tpu.memory_space<vmem>>, vector<1x1x2x8x128xf32>
    %80 = vector.shape_cast %79 : vector<1x1x2x8x128xf32> to vector<2x8x128xf32>
    %81 = vector.shape_cast %78 : vector<2x8x128xf32> to vector<1x1x2x8x128xf32>
    tpu.vector_store %arg4[%c0_50, %c1_51, %c0_52, %c0_53, %c0_54], %81 {strides = array<i32>} : memref<1x4x2x8x128xf32, #tpu.memory_space<vmem>>, vector<1x1x2x8x128xf32>,
    %c0_55 = arith.constant 0 : index
    %c1_56 = arith.constant 1 : index
    %c0_57 = arith.constant 0 : index
    %c0_58 = arith.constant 0 : index
    %c0_59 = arith.constant 0 : index
    %82 = vector.load %arg5[%c0_55, %c1_56, %c0_57, %c0_58, %c0_59] : memref<1x4x2x8x128xf32, #tpu.memory_space<vmem>>, vector<1x1x2x8x128xf32>
    %83 = vector.shape_cast %82 : vector<1x1x2x8x128xf32> to vector<2x8x128xf32>
    %84 = arith.addf %83, %72 : vector<2x8x128xf32>
    %c0_60 = arith.constant 0 : index
    %c1_61 = arith.constant 1 : index
    %c0_62 = arith.constant 0 : index
    %c0_63 = arith.constant 0 : index
    %c0_64 = arith.constant 0 : index
    %85 = vector.load %arg5[%c0_60, %c1_61, %c0_62, %c0_63, %c0_64] : memref<1x4x2x8x128xf32, #tpu.memory_space<vmem>>, vector<1x1x2x8x128xf32>
    %86 = vector.shape_cast %85 : vector<1x1x2x8x128xf32> to vector<2x8x128xf32>
    %87 = vector.shape_cast %84 : vector<2x8x128xf32> to vector<1x1x2x8x128xf32>
    tpu.vector_store %arg5[%c0_60, %c1_61, %c0_62, %c0_63, %c0_64], %87 {strides = array<i32>} : memref<1x4x2x8x128xf32, #tpu.memory_space<vmem>>, vector<1x1x2x8x128xf32>,
    %c0_65 = arith.constant 0 : index
    %c1_66 = arith.constant 1 : index
    %c0_67 = arith.constant 0 : index
    %c0_68 = arith.constant 0 : index
    %c0_69 = arith.constant 0 : index
    %88 = vector.load %arg6[%c0_65, %c1_66, %c0_67, %c0_68, %c0_69] : memref<1x4x2x8x128xf32, #tpu.memory_space<vmem>>, vector<1x1x2x8x128xf32>
    %89 = vector.shape_cast %88 : vector<1x1x2x8x128xf32> to vector<2x8x128xf32>
    %90 = arith.addf %89, %75 : vector<2x8x128xf32>
    %c0_70 = arith.constant 0 : index
    %c1_71 = arith.constant 1 : index
    %c0_72 = arith.constant 0 : index
    %c0_73 = arith.constant 0 : index
    %c0_74 = arith.constant 0 : index
    %91 = vector.load %arg6[%c0_70, %c1_71, %c0_72, %c0_73, %c0_74] : memref<1x4x2x8x128xf32, #tpu.memory_space<vmem>>, vector<1x1x2x8x128xf32>
    %92 = vector.shape_cast %91 : vector<1x1x2x8x128xf32> to vector<2x8x128xf32>
    %93 = vector.shape_cast %90 : vector<2x8x128xf32> to vector<1x1x2x8x128xf32>
    tpu.vector_store %arg6[%c0_70, %c1_71, %c0_72, %c0_73, %c0_74], %93 {strides = array<i32>} : memref<1x4x2x8x128xf32, #tpu.memory_space<vmem>>, vector<1x1x2x8x128xf32>,
    %94 = arith.mulf %27, %35 : vector<2x8x128xf32>
    %c2_i32 = arith.constant 2 : i32
    %95 = vector.broadcast %c2_i32 : i32 to vector<2x8x128xi32>
    %96 = arith.cmpi eq, %4, %95 : vector<2x8x128xi32>
    %cst_75 = arith.constant 0.000000e+00 : f32
    %97 = vector.broadcast %cst_75 : f32 to vector<2x8x128xf32>
    %98 = arith.select %96, %94, %97 : vector<2x8x128xi1>, vector<2x8x128xf32>
    %cst_76 = arith.constant 0.000000e+00 : f32
    %99 = vector.broadcast %cst_76 : f32 to vector<2x8x128xf32>
    %100 = arith.select %37, %94, %99 : vector<2x8x128xi1>, vector<2x8x128xf32>
    %cst_77 = arith.constant 1.000000e+00 : f32
    %cst_78 = arith.constant 0.000000e+00 : f32
    %101 = vector.broadcast %cst_77 : f32 to vector<2x8x128xf32>
    %102 = vector.broadcast %cst_78 : f32 to vector<2x8x128xf32>
    %103 = arith.select %96, %101, %102 : vector<2x8x128xi1>, vector<2x8x128xf32>
    %c0_79 = arith.constant 0 : index
    %c2 = arith.constant 2 : index
    %c0_80 = arith.constant 0 : index
    %c0_81 = arith.constant 0 : index
    %c0_82 = arith.constant 0 : index
    %104 = vector.load %arg4[%c0_79, %c2, %c0_80, %c0_81, %c0_82] : memref<1x4x2x8x128xf32, #tpu.memory_space<vmem>>, vector<1x1x2x8x128xf32>
    %105 = vector.shape_cast %104 : vector<1x1x2x8x128xf32> to vector<2x8x128xf32>
    %106 = arith.addf %105, %98 : vector<2x8x128xf32>
    %c0_83 = arith.constant 0 : index
    %c2_84 = arith.constant 2 : index
    %c0_85 = arith.constant 0 : index
    %c0_86 = arith.constant 0 : index
    %c0_87 = arith.constant 0 : index
    %107 = vector.load %arg4[%c0_83, %c2_84, %c0_85, %c0_86, %c0_87] : memref<1x4x2x8x128xf32, #tpu.memory_space<vmem>>, vector<1x1x2x8x128xf32>
    %108 = vector.shape_cast %107 : vector<1x1x2x8x128xf32> to vector<2x8x128xf32>
    %109 = vector.shape_cast %106 : vector<2x8x128xf32> to vector<1x1x2x8x128xf32>
    tpu.vector_store %arg4[%c0_83, %c2_84, %c0_85, %c0_86, %c0_87], %109 {strides = array<i32>} : memref<1x4x2x8x128xf32, #tpu.memory_space<vmem>>, vector<1x1x2x8x128xf32>,
    %c0_88 = arith.constant 0 : index
    %c2_89 = arith.constant 2 : index
    %c0_90 = arith.constant 0 : index
    %c0_91 = arith.constant 0 : index
    %c0_92 = arith.constant 0 : index
    %110 = vector.load %arg5[%c0_88, %c2_89, %c0_90, %c0_91, %c0_92] : memref<1x4x2x8x128xf32, #tpu.memory_space<vmem>>, vector<1x1x2x8x128xf32>
    %111 = vector.shape_cast %110 : vector<1x1x2x8x128xf32> to vector<2x8x128xf32>
    %112 = arith.addf %111, %100 : vector<2x8x128xf32>
    %c0_93 = arith.constant 0 : index
    %c2_94 = arith.constant 2 : index
    %c0_95 = arith.constant 0 : index
    %c0_96 = arith.constant 0 : index
    %c0_97 = arith.constant 0 : index
    %113 = vector.load %arg5[%c0_93, %c2_94, %c0_95, %c0_96, %c0_97] : memref<1x4x2x8x128xf32, #tpu.memory_space<vmem>>, vector<1x1x2x8x128xf32>
    %114 = vector.shape_cast %113 : vector<1x1x2x8x128xf32> to vector<2x8x128xf32>
    %115 = vector.shape_cast %112 : vector<2x8x128xf32> to vector<1x1x2x8x128xf32>
    tpu.vector_store %arg5[%c0_93, %c2_94, %c0_95, %c0_96, %c0_97], %115 {strides = array<i32>} : memref<1x4x2x8x128xf32, #tpu.memory_space<vmem>>, vector<1x1x2x8x128xf32>,
    %c0_98 = arith.constant 0 : index
    %c2_99 = arith.constant 2 : index
    %c0_100 = arith.constant 0 : index
    %c0_101 = arith.constant 0 : index
    %c0_102 = arith.constant 0 : index
    %116 = vector.load %arg6[%c0_98, %c2_99, %c0_100, %c0_101, %c0_102] : memref<1x4x2x8x128xf32, #tpu.memory_space<vmem>>, vector<1x1x2x8x128xf32>
    %117 = vector.shape_cast %116 : vector<1x1x2x8x128xf32> to vector<2x8x128xf32>
    %118 = arith.addf %117, %103 : vector<2x8x128xf32>
    %c0_103 = arith.constant 0 : index
    %c2_104 = arith.constant 2 : index
    %c0_105 = arith.constant 0 : index
    %c0_106 = arith.constant 0 : index
    %c0_107 = arith.constant 0 : index
    %119 = vector.load %arg6[%c0_103, %c2_104, %c0_105, %c0_106, %c0_107] : memref<1x4x2x8x128xf32, #tpu.memory_space<vmem>>, vector<1x1x2x8x128xf32>
    %120 = vector.shape_cast %119 : vector<1x1x2x8x128xf32> to vector<2x8x128xf32>
    %121 = vector.shape_cast %118 : vector<2x8x128xf32> to vector<1x1x2x8x128xf32>
    tpu.vector_store %arg6[%c0_103, %c2_104, %c0_105, %c0_106, %c0_107], %121 {strides = array<i32>} : memref<1x4x2x8x128xf32, #tpu.memory_space<vmem>>, vector<1x1x2x8x128xf32>,
    %122 = arith.mulf %31, %35 : vector<2x8x128xf32>
    %c3_i32 = arith.constant 3 : i32
    %123 = vector.broadcast %c3_i32 : i32 to vector<2x8x128xi32>
    %124 = arith.cmpi eq, %4, %123 : vector<2x8x128xi32>
    %cst_108 = arith.constant 0.000000e+00 : f32
    %125 = vector.broadcast %cst_108 : f32 to vector<2x8x128xf32>
    %126 = arith.select %124, %122, %125 : vector<2x8x128xi1>, vector<2x8x128xf32>
    %cst_109 = arith.constant 0.000000e+00 : f32
    %127 = vector.broadcast %cst_109 : f32 to vector<2x8x128xf32>
    %128 = arith.select %37, %122, %127 : vector<2x8x128xi1>, vector<2x8x128xf32>
    %cst_110 = arith.constant 1.000000e+00 : f32
    %cst_111 = arith.constant 0.000000e+00 : f32
    %129 = vector.broadcast %cst_110 : f32 to vector<2x8x128xf32>
    %130 = vector.broadcast %cst_111 : f32 to vector<2x8x128xf32>
    %131 = arith.select %124, %129, %130 : vector<2x8x128xi1>, vector<2x8x128xf32>
    %c0_112 = arith.constant 0 : index
    %c3 = arith.constant 3 : index
    %c0_113 = arith.constant 0 : index
    %c0_114 = arith.constant 0 : index
    %c0_115 = arith.constant 0 : index
    %132 = vector.load %arg4[%c0_112, %c3, %c0_113, %c0_114, %c0_115] : memref<1x4x2x8x128xf32, #tpu.memory_space<vmem>>, vector<1x1x2x8x128xf32>
    %133 = vector.shape_cast %132 : vector<1x1x2x8x128xf32> to vector<2x8x128xf32>
    %134 = arith.addf %133, %126 : vector<2x8x128xf32>
    %c0_116 = arith.constant 0 : index
    %c3_117 = arith.constant 3 : index
    %c0_118 = arith.constant 0 : index
    %c0_119 = arith.constant 0 : index
    %c0_120 = arith.constant 0 : index
    %135 = vector.load %arg4[%c0_116, %c3_117, %c0_118, %c0_119, %c0_120] : memref<1x4x2x8x128xf32, #tpu.memory_space<vmem>>, vector<1x1x2x8x128xf32>
    %136 = vector.shape_cast %135 : vector<1x1x2x8x128xf32> to vector<2x8x128xf32>
    %137 = vector.shape_cast %134 : vector<2x8x128xf32> to vector<1x1x2x8x128xf32>
    tpu.vector_store %arg4[%c0_116, %c3_117, %c0_118, %c0_119, %c0_120], %137 {strides = array<i32>} : memref<1x4x2x8x128xf32, #tpu.memory_space<vmem>>, vector<1x1x2x8x128xf32>,
    %c0_121 = arith.constant 0 : index
    %c3_122 = arith.constant 3 : index
    %c0_123 = arith.constant 0 : index
    %c0_124 = arith.constant 0 : index
    %c0_125 = arith.constant 0 : index
    %138 = vector.load %arg5[%c0_121, %c3_122, %c0_123, %c0_124, %c0_125] : memref<1x4x2x8x128xf32, #tpu.memory_space<vmem>>, vector<1x1x2x8x128xf32>
    %139 = vector.shape_cast %138 : vector<1x1x2x8x128xf32> to vector<2x8x128xf32>
    %140 = arith.addf %139, %128 : vector<2x8x128xf32>
    %c0_126 = arith.constant 0 : index
    %c3_127 = arith.constant 3 : index
    %c0_128 = arith.constant 0 : index
    %c0_129 = arith.constant 0 : index
    %c0_130 = arith.constant 0 : index
    %141 = vector.load %arg5[%c0_126, %c3_127, %c0_128, %c0_129, %c0_130] : memref<1x4x2x8x128xf32, #tpu.memory_space<vmem>>, vector<1x1x2x8x128xf32>
    %142 = vector.shape_cast %141 : vector<1x1x2x8x128xf32> to vector<2x8x128xf32>
    %143 = vector.shape_cast %140 : vector<2x8x128xf32> to vector<1x1x2x8x128xf32>
    tpu.vector_store %arg5[%c0_126, %c3_127, %c0_128, %c0_129, %c0_130], %143 {strides = array<i32>} : memref<1x4x2x8x128xf32, #tpu.memory_space<vmem>>, vector<1x1x2x8x128xf32>,
    %c0_131 = arith.constant 0 : index
    %c3_132 = arith.constant 3 : index
    %c0_133 = arith.constant 0 : index
    %c0_134 = arith.constant 0 : index
    %c0_135 = arith.constant 0 : index
    %144 = vector.load %arg6[%c0_131, %c3_132, %c0_133, %c0_134, %c0_135] : memref<1x4x2x8x128xf32, #tpu.memory_space<vmem>>, vector<1x1x2x8x128xf32>
    %145 = vector.shape_cast %144 : vector<1x1x2x8x128xf32> to vector<2x8x128xf32>
    %146 = arith.addf %145, %131 : vector<2x8x128xf32>
    %c0_136 = arith.constant 0 : index
    %c3_137 = arith.constant 3 : index
    %c0_138 = arith.constant 0 : index
    %c0_139 = arith.constant 0 : index
    %c0_140 = arith.constant 0 : index
    %147 = vector.load %arg6[%c0_136, %c3_137, %c0_138, %c0_139, %c0_140] : memref<1x4x2x8x128xf32, #tpu.memory_space<vmem>>, vector<1x1x2x8x128xf32>
    %148 = vector.shape_cast %147 : vector<1x1x2x8x128xf32> to vector<2x8x128xf32>
    %149 = vector.shape_cast %146 : vector<2x8x128xf32> to vector<1x1x2x8x128xf32>
    tpu.vector_store %arg6[%c0_136, %c3_137, %c0_138, %c0_139, %c0_140], %149 {strides = array<i32>} : memref<1x4x2x8x128xf32, #tpu.memory_space<vmem>>, vector<1x1x2x8x128xf32>,
    return
  }
  func.func @transform_0(%arg0: i32, %arg1: i32) -> (i32, i32, i32, i32) {
    %c1_i32 = arith.constant 1 : i32
    %0 = arith.muli %arg0, %c1_i32 : i32
    %1 = arith.addi %0, %arg1 : i32
    %c0_i32 = arith.constant 0 : i32
    %c0_i32_0 = arith.constant 0 : i32
    %c0_i32_1 = arith.constant 0 : i32
    %c0_i32_2 = arith.constant 0 : i32
    return %c0_i32, %c0_i32_0, %1, %c0_i32_1 : i32, i32, i32, i32
  }
  func.func @transform_1(%arg0: i32, %arg1: i32) -> (i32, i32, i32) {
    %c1_i32 = arith.constant 1 : i32
    %0 = arith.muli %arg0, %c1_i32 : i32
    %1 = arith.addi %0, %arg1 : i32
    %c0_i32 = arith.constant 0 : i32
    %c0_i32_0 = arith.constant 0 : i32
    %c0_i32_1 = arith.constant 0 : i32
    return %c0_i32, %1, %c0_i32_0 : i32, i32, i32
  }
  func.func @transform_2(%arg0: i32, %arg1: i32) -> (i32, i32, i32, i32, i32) {
    %c0_i32 = arith.constant 0 : i32
    %c0_i32_0 = arith.constant 0 : i32
    %c0_i32_1 = arith.constant 0 : i32
    %c0_i32_2 = arith.constant 0 : i32
    %c0_i32_3 = arith.constant 0 : i32
    return %arg0, %c0_i32, %c0_i32_0, %c0_i32_1, %c0_i32_2 : i32, i32, i32, i32, i32
  }
  func.func @transform_3(%arg0: i32, %arg1: i32) -> (i32, i32, i32, i32, i32) {
    %c0_i32 = arith.constant 0 : i32
    %c0_i32_0 = arith.constant 0 : i32
    %c0_i32_1 = arith.constant 0 : i32
    %c0_i32_2 = arith.constant 0 : i32
    %c0_i32_3 = arith.constant 0 : i32
    return %arg0, %c0_i32, %c0_i32_0, %c0_i32_1, %c0_i32_2 : i32, i32, i32, i32, i32
  }
  func.func @transform_4(%arg0: i32, %arg1: i32) -> (i32, i32, i32, i32, i32) {
    %c0_i32 = arith.constant 0 : i32
    %c0_i32_0 = arith.constant 0 : i32
    %c0_i32_1 = arith.constant 0 : i32
    %c0_i32_2 = arith.constant 0 : i32
    %c0_i32_3 = arith.constant 0 : i32
    return %arg0, %c0_i32, %c0_i32_0, %c0_i32_1, %c0_i32_2 : i32, i32, i32, i32, i32
  }
}

</mosaic_0001>

<llo_original>
// kernel: tpu_custom_call.1
$region0: #{tpu_custom_call.1}
  #allocation0 [shape = 'u32[]', space=smem, size = 0x4, offset = 0x4, fixed_abs, tag = 'smem constant byte address 0x4 - core index']
  #allocation1 [shape = 'u32[144,128]{1,0:T(1,128)}', space=vmem, size = 0x12000, scoped, tag = 'internal scratch']
  %s0 = inlined_call_operand.hbm [shape: f32[2,4,16,128], index: 0, kind: input, shape index: {}]
  %s1 = inlined_call_operand.hbm [shape: s32[2,16,128], index: 1, kind: input, shape index: {}]
  %s2 = inlined_call_operand.hbm [shape: f32[2,4,2,8,128], index: 2, kind: output, shape index: {0}]
  %s3 = inlined_call_operand.hbm [shape: f32[2,4,2,8,128], index: 3, kind: output, shape index: {1}]
  %s4 = inlined_call_operand.hbm [shape: f32[2,4,2,8,128], index: 4, kind: output, shape index: {2}]
  %5 = xla_tuple %s2, %s3, %s4
  %s6 = sld [smem:[#allocation0]]
  $region69: #{tpu_custom_call.1} parent=0
    _
  %s8 = ssub.s32 1, %s6
  %s9 = scalar_select 0, %s8, %s6
  $region1: #{tpu_custom_call.1} parent=0
    #allocation2 [shape = 'u8[65536]{0}', space=vmem, size = 0x10000, scoped, tag = 'input window, operand 0']
    #allocation3 [shape = 's32[2]{0}', space=sflag, size = 0x8, scoped, tag = 'scoped memory for tpu_custom_call.1']
    #allocation4 [shape = 's32[2]{0}', space=sflag, size = 0x8, scoped, tag = 'scoped memory for tpu_custom_call.1']
    #allocation5 [shape = 'u8[16384]{0}', space=vmem, size = 0x4000, scoped, tag = 'input window, operand 1']
    #allocation6 [shape = 's32[2]{0}', space=sflag, size = 0x8, scoped, tag = 'scoped memory for tpu_custom_call.1']
    #allocation7 [shape = 'u8[65536]{0}', space=vmem, size = 0x10000, scoped, tag = 'output window, operand 0']
    #allocation8 [shape = 'u8[65536]{0}', space=vmem, size = 0x10000, scoped, tag = 'output window, operand 1']
    #allocation9 [shape = 's32[2]{0}', space=sflag, size = 0x8, scoped, tag = 'scoped memory for tpu_custom_call.1']
    #allocation10 [shape = 'u8[65536]{0}', space=vmem, size = 0x10000, scoped, tag = 'output window, operand 2']
    %10 = vsyncpa [#allocation3], 0
    %s11 = scalar_lea.sflag [#allocation3], 1
    %12 = vsyncpa %s11, 0
    %13 = vsyncpa [#allocation6], 0
    %s14 = scalar_lea.sflag [#allocation6], 1
    %15 = vsyncpa %s14, 0
    %16 = vsyncpa [#allocation4], 0
    %s17 = scalar_lea.sflag [#allocation4], 1
    %18 = vsyncpa %s17, 0
    %19 = vsyncpa [#allocation9], 0
    %s20 = scalar_lea.sflag [#allocation9], 1
    %21 = vsyncpa %s20, 0
    loop: start=0, step=1, limit=4
    $region2: #{tpu_custom_call.1} parent=1 // loop_pre_header
      _
    $region3: #{tpu_custom_call.1} parent=1 // loop_header
      %s23 = sphi 0, %s27
      %p24 = scmp.ge.s32.totalorder %s23, 4
      %s30 = sphi 0, %s42
      %s31 = sphi 0, %s38
      %s32 = sphi 0, %s30
      %s33 = sphi 0, %s31
      %s34 = sphi 0, %s32
      %s35 = sphi 0, %s33
      %s47 = sphi 0, %s49
      %s50 = sphi 0, %s47
      %s51 = sphi 0, %s50
      %s67 = sphi 0, %s51
      %s75 = sphi 0, %s77
      %s78 = sphi 0, %s75
      %s79 = sphi 0, %s78
      %s95 = sphi 0, %s79
      %s101 = sphi 0, %s103
      %s104 = sphi 0, %s101
      %s105 = sphi 0, %s104
      %s121 = sphi 0, %s105
      %s127 = sphi 0, %s129
      %s130 = sphi 0, %s127
      %s131 = sphi 0, %s130
      %s147 = sphi 0, %s131
      %s153 = sphi 0, %s155
      %s156 = sphi 0, %s153
      %s157 = sphi 0, %s156
      %s173 = sphi 0, %s157
    $region4: #{tpu_custom_call.1} parent=1 // loop_header_branch
      %26 = sbr.rel (%p24) target = $region8
    $region5: #{tpu_custom_call.1} parent=1 // loop_body
      %s28 = ssub.s32 %s23, 1
      %s29 = ssub.s32 %s23, 2
      %s36 = sadd.s32 1, %s31
      %p37 = scmp.ge.s32.totalorder %s36, 1
      %s38 = scalar_select %p37, 0, %s36
      %s39 = sadd.s32 1, %s30
      %s40 = scalar_select %p37, %s39, %s30
      %p41 = scmp.ge.s32.totalorder %s40, 2
      %s42 = scalar_select %p41, 0, %s40
      %s43 = sadd.s32 %s30, %s31
      %s44 = sadd.s32 %s42, %s38
      %s45 = ssub.s32 %s43, %s44
      %p46 = scmp.eq.s32.totalorder %s45, 0
      %s48 = sadd.s32 %s47, 1
      %s49 = scalar_select %p46, %s47, %s48
      %p52 = pneg %p46
      %p53 = scmp.eq.s32.totalorder %s23, 1
      %p54 = por %p52, %p53
      %p55 = scmp.ne.s32.totalorder %s47, %s50
      %p56 = scmp.eq.s32.totalorder %s23, 0
      %p57 = por %p55, %p56
      %p58 = scmp.ne.s32.totalorder %s47, %s50
      %p59 = scmp.eq.s32.totalorder %s28, 1
      %p60 = por %p58, %p59
      %p61 = scmp.ne.s32.totalorder %s50, %s51
      %p62 = scmp.eq.s32.totalorder %s28, 0
      %p63 = por %p61, %p62
      %p64 = scmp.ne.s32.totalorder %s50, %s51
      %p65 = scmp.eq.s32.totalorder %s29, 1
      %p66 = por %p64, %p65
      %p68 = scmp.ne.s32.totalorder %s51, %s67
      %p69 = scmp.eq.s32.totalorder %s29, 0
      %p70 = por %p68, %p69
      %s71 = sadd.s32 %s30, %s31
      %s72 = sadd.s32 %s42, %s38
      %s73 = ssub.s32 %s71, %s72
      %p74 = scmp.eq.s32.totalorder %s73, 0
      %s76 = sadd.s32 %s75, 1
      %s77 = scalar_select %p74, %s75, %s76
      %p80 = pneg %p74
      %p81 = scmp.eq.s32.totalorder %s23, 1
      %p82 = por %p80, %p81
      %p83 = scmp.ne.s32.totalorder %s75, %s78
      %p84 = scmp.eq.s32.totalorder %s23, 0
      %p85 = por %p83, %p84
      %p86 = scmp.ne.s32.totalorder %s75, %s78
      %p87 = scmp.eq.s32.totalorder %s28, 1
      %p88 = por %p86, %p87
      %p89 = scmp.ne.s32.totalorder %s78, %s79
      %p90 = scmp.eq.s32.totalorder %s28, 0
      %p91 = por %p89, %p90
      %p92 = scmp.ne.s32.totalorder %s78, %s79
      %p93 = scmp.eq.s32.totalorder %s29, 1
      %p94 = por %p92, %p93
      %p96 = scmp.ne.s32.totalorder %s79, %s95
      %p97 = scmp.eq.s32.totalorder %s29, 0
      %p98 = por %p96, %p97
      %s99 = ssub.s32 %s30, %s42
      %p100 = scmp.eq.s32.totalorder %s99, 0
      %s102 = sadd.s32 %s101, 1
      %s103 = scalar_select %p100, %s101, %s102
      %p106 = pneg %p100
      %p107 = scmp.eq.s32.totalorder %s23, 1
      %p108 = por %p106, %p107
      %p109 = scmp.ne.s32.totalorder %s101, %s104
      %p110 = scmp.eq.s32.totalorder %s23, 0
      %p111 = por %p109, %p110
      %p112 = scmp.ne.s32.totalorder %s101, %s104
      %p113 = scmp.eq.s32.totalorder %s28, 1
      %p114 = por %p112, %p113
      %p115 = scmp.ne.s32.totalorder %s104, %s105
      %p116 = scmp.eq.s32.totalorder %s28, 0
      %p117 = por %p115, %p116
      %p118 = scmp.ne.s32.totalorder %s104, %s105
      %p119 = scmp.eq.s32.totalorder %s29, 1
      %p120 = por %p118, %p119
      %p122 = scmp.ne.s32.totalorder %s105, %s121
      %p123 = scmp.eq.s32.totalorder %s29, 0
      %p124 = por %p122, %p123
      %s125 = ssub.s32 %s30, %s42
      %p126 = scmp.eq.s32.totalorder %s125, 0
      %s128 = sadd.s32 %s127, 1
      %s129 = scalar_select %p126, %s127, %s128
      %p132 = pneg %p126
      %p133 = scmp.eq.s32.totalorder %s23, 1
      %p134 = por %p132, %p133
      %p135 = scmp.ne.s32.totalorder %s127, %s130
      %p136 = scmp.eq.s32.totalorder %s23, 0
      %p137 = por %p135, %p136
      %p138 = scmp.ne.s32.totalorder %s127, %s130
      %p139 = scmp.eq.s32.totalorder %s28, 1
      %p140 = por %p138, %p139
      %p141 = scmp.ne.s32.totalorder %s130, %s131
      %p142 = scmp.eq.s32.totalorder %s28, 0
      %p143 = por %p141, %p142
      %p144 = scmp.ne.s32.totalorder %s130, %s131
      %p145 = scmp.eq.s32.totalorder %s29, 1
      %p146 = por %p144, %p145
      %p148 = scmp.ne.s32.totalorder %s131, %s147
      %p149 = scmp.eq.s32.totalorder %s29, 0
      %p150 = por %p148, %p149
      %s151 = ssub.s32 %s30, %s42
      %p152 = scmp.eq.s32.totalorder %s151, 0
      %s154 = sadd.s32 %s153, 1
      %s155 = scalar_select %p152, %s153, %s154
      %p158 = pneg %p152
      %p159 = scmp.eq.s32.totalorder %s23, 1
      %p160 = por %p158, %p159
      %p161 = scmp.ne.s32.totalorder %s153, %s156
      %p162 = scmp.eq.s32.totalorder %s23, 0
      %p163 = por %p161, %p162
      %p164 = scmp.ne.s32.totalorder %s153, %s156
      %p165 = scmp.eq.s32.totalorder %s28, 1
      %p166 = por %p164, %p165
      %p167 = scmp.ne.s32.totalorder %s156, %s157
      %p168 = scmp.eq.s32.totalorder %s28, 0
      %p169 = por %p167, %p168
      %p170 = scmp.ne.s32.totalorder %s156, %s157
      %p171 = scmp.eq.s32.totalorder %s29, 1
      %p172 = por %p170, %p171
      %p174 = scmp.ne.s32.totalorder %s157, %s173
      %p175 = scmp.eq.s32.totalorder %s29, 0
      %p176 = por %p174, %p175
      %p177 = scmp.le.s32.totalorder 1, %s23
      %p178 = scmp.lt.s32.totalorder %s23, 3
      %p179 = pnand %p177, %p178
      %p180 = pneg %p179
      // Predicated region
      $region9: #{tpu_custom_call.1} parent=5 // pred_check
        _
      $region10: #{tpu_custom_call.1} parent=5 // pred_check_branch
        %182 = sbr.rel (%p179) target = $region12
      $region11: #{tpu_custom_call.1} parent=5 // pred_region
        %s183 = ssub.s32 %s23, 1
      $region12: #{tpu_custom_call.1} parent=5 // pred_fallthru
        _
      %p184 = scmp.lt.s32.totalorder %s23, 2
      // Predicated region
      $region13: #{tpu_custom_call.1} parent=5 // pred_check
        %p185 = pneg %p184
      $region14: #{tpu_custom_call.1} parent=5 // pred_check_branch
        %187 = sbr.rel (%p185) target = $region16
      $region15: #{tpu_custom_call.1} parent=5 // pred_region
        // Predicated region
        $region17: #{tpu_custom_call.1} parent=15 // pred_check
          %p188 = pneg %p57
        $region18: #{tpu_custom_call.1} parent=15 // pred_check_branch
          %190 = sbr.rel (%p188) target = $region20
        $region19: #{tpu_custom_call.1} parent=15 // pred_region
          %s191 = sand.u32 %s47, 1
          %s192 = scalar_lea.sflag [#allocation3], %s191
          %s193 = sand.u32 %s47, 1
          %s194 = smul.addr %s193, 64
          %s195 = scalar_lea.vmem [#allocation2], %s194
          %s196 = sadd.s32 %s30, %s31
          %s198 = ssub.s32 1024, 1024
          %199 = vsyncadd %s192, %s198
          %s200 = smul.addr %s196, 128
          %s201 = scalar_lea.hbm %s0, %s200
          %s202 = sshll.u32 %s195, 4
          %s203 = int_to_ptr.vmem [resolvable:$true] %s202
          %208 = dma.hbm_to_vmem [thread:$0]  %s201, 1024, %s203, %s192, 256, 128, 8
        $region20: #{tpu_custom_call.1} parent=15 // pred_fallthru
          _
        // Predicated region
        $region21: #{tpu_custom_call.1} parent=15 // pred_check
          %p209 = pneg %p85
        $region22: #{tpu_custom_call.1} parent=15 // pred_check_branch
          %211 = sbr.rel (%p209) target = $region24
        $region23: #{tpu_custom_call.1} parent=15 // pred_region
          %s212 = sand.u32 %s75, 1
          %s213 = scalar_lea.sflag [#allocation6], %s212
          %s214 = sand.u32 %s75, 1
          %s215 = smul.addr %s214, 16
          %s216 = scalar_lea.vmem [#allocation5], %s215
          %s217 = sadd.s32 %s30, %s31
          %s219 = ssub.s32 256, 256
          %220 = vsyncadd %s213, %s219
          %s221 = smul.addr %s217, 128
          %s222 = scalar_lea.hbm %s1, %s221
          %s223 = sshll.u32 %s216, 4
          %s224 = int_to_ptr.vmem [resolvable:$true] %s223
          %229 = dma.hbm_to_vmem [thread:$0]  %s222, 256, %s224, %s213, 256, 128, 8
        $region24: #{tpu_custom_call.1} parent=15 // pred_fallthru
          _
      $region16: #{tpu_custom_call.1} parent=5 // pred_fallthru
        _
      %p230 = scmp.le.s32.totalorder 1, %s23
      %p231 = scmp.lt.s32.totalorder %s23, 3
      %p232 = pnand %p230, %p231
      %p233 = pneg %p232
      // Predicated region
      $region25: #{tpu_custom_call.1} parent=5 // pred_check
        _
      $region26: #{tpu_custom_call.1} parent=5 // pred_check_branch
        %235 = sbr.rel (%p232) target = $region28
      $region27: #{tpu_custom_call.1} parent=5 // pred_region
        %s236 = ssub.s32 %s23, 1
        %s237 = sand.u32 %s50, 1
        %s238 = scalar_lea.sflag [#allocation3], %s237
        %s239 = sand.u32 %s50, 1
        %s240 = smul.addr %s239, 64
        %s241 = scalar_lea.vmem [#allocation2], %s240
        // Predicated region
        $region29: #{tpu_custom_call.1} parent=27 // pred_check
          %p242 = pneg %p63
        $region30: #{tpu_custom_call.1} parent=27 // pred_check_branch
          %244 = sbr.rel (%p242) target = $region32
        $region31: #{tpu_custom_call.1} parent=27 // pred_region
          %245 = dma.done %s238, 1024
        $region32: #{tpu_custom_call.1} parent=27 // pred_fallthru
          _
        %s246 = sand.u32 %s78, 1
        %s247 = scalar_lea.sflag [#allocation6], %s246
        %s248 = sand.u32 %s78, 1
        %s249 = smul.addr %s248, 16
        %s250 = scalar_lea.vmem [#allocation5], %s249
        // Predicated region
        $region33: #{tpu_custom_call.1} parent=27 // pred_check
          %p251 = pneg %p91
        $region34: #{tpu_custom_call.1} parent=27 // pred_check_branch
          %253 = sbr.rel (%p251) target = $region36
        $region35: #{tpu_custom_call.1} parent=27 // pred_region
          %254 = dma.done %s247, 256
        $region36: #{tpu_custom_call.1} parent=27 // pred_fallthru
          _
        %s255 = sand.u32 %s50, 1
        %s256 = scalar_lea.sflag [#allocation3], %s255
        %s257 = sand.u32 %s50, 1
        %s258 = smul.addr %s257, 64
        %s259 = scalar_lea.vmem [#allocation2], %s258
        %p260 = pneg %p63
        %p261 = pneg %p60
        %s262 = sand.u32 %s78, 1
        %s263 = scalar_lea.sflag [#allocation6], %s262
        %s264 = sand.u32 %s78, 1
        %s265 = smul.addr %s264, 16
        %s266 = scalar_lea.vmem [#allocation5], %s265
        %p267 = pneg %p91
        %p268 = pneg %p88
        %p269 = pneg %p117
        %p270 = pneg %p114
        %s271 = sand.u32 %s104, 1
        %s272 = scalar_lea.sflag [#allocation4], %s271
        %s273 = sand.u32 %s104, 1
        %s274 = smul.addr %s273, 64
        %s275 = scalar_lea.vmem [#allocation7], %s274
        %p276 = pneg %p143
        %p277 = pneg %p140
        %s278 = sand.u32 %s28, 1
        %s279 = scalar_lea.sflag [#allocation9], %s278
        %s280 = sand.u32 %s130, 1
        %s281 = smul.addr %s280, 64
        %s282 = scalar_lea.vmem [#allocation8], %s281
        %p283 = pneg %p169
        %p284 = pneg %p166
        %s285 = sand.u32 %s28, 1
        %s286 = scalar_lea.sflag [#allocation9], %s285
        %s287 = sand.u32 %s156, 1
        %s288 = smul.addr %s287, 64
        %s289 = scalar_lea.vmem [#allocation10], %s288
        %s290 = sadd.s32 %s32, %s33
        %s291 = sadd.s32 %s32, %s33
        %p292 = scmp.eq.s32.totalorder %s33, 0
        // Predicated region
        $region37: #{tpu_custom_call.1} parent=27 // pred_check
          %p293 = pneg %p292
        $region38: #{tpu_custom_call.1} parent=27 // pred_check_branch
          %295 = sbr.rel (%p293) target = $region40
        $region39: #{tpu_custom_call.1} parent=27 // pred_region
          %296 = vst [vmem:[%s275] sm:$0xff] 0.0
          %297 = vst [vmem:[%s275 + $0x8] sm:$0xff] 0.0
          %298 = vst [vmem:[%s275 + $0x10] sm:$0xff] 0.0
          %299 = vst [vmem:[%s275 + $0x18] sm:$0xff] 0.0
          %300 = vst [vmem:[%s275 + $0x20] sm:$0xff] 0.0
          %301 = vst [vmem:[%s275 + $0x28] sm:$0xff] 0.0
          %302 = vst [vmem:[%s275 + $0x30] sm:$0xff] 0.0
          %303 = vst [vmem:[%s275 + $0x38] sm:$0xff] 0.0
          %304 = vst [vmem:[%s282] sm:$0xff] 0.0
          %305 = vst [vmem:[%s282 + $0x8] sm:$0xff] 0.0
          %306 = vst [vmem:[%s282 + $0x10] sm:$0xff] 0.0
          %307 = vst [vmem:[%s282 + $0x18] sm:$0xff] 0.0
          %308 = vst [vmem:[%s282 + $0x20] sm:$0xff] 0.0
          %309 = vst [vmem:[%s282 + $0x28] sm:$0xff] 0.0
          %310 = vst [vmem:[%s282 + $0x30] sm:$0xff] 0.0
          %311 = vst [vmem:[%s282 + $0x38] sm:$0xff] 0.0
          %312 = vst [vmem:[%s289] sm:$0xff] 0.0
          %313 = vst [vmem:[%s289 + $0x8] sm:$0xff] 0.0
          %314 = vst [vmem:[%s289 + $0x10] sm:$0xff] 0.0
          %315 = vst [vmem:[%s289 + $0x18] sm:$0xff] 0.0
          %316 = vst [vmem:[%s289 + $0x20] sm:$0xff] 0.0
          %317 = vst [vmem:[%s289 + $0x28] sm:$0xff] 0.0
          %318 = vst [vmem:[%s289 + $0x30] sm:$0xff] 0.0
          %319 = vst [vmem:[%s289 + $0x38] sm:$0xff] 0.0
        $region40: #{tpu_custom_call.1} parent=27 // pred_fallthru
          _
        %v320 = vld [vmem:[%s241] sm:$0xff]
        %v321 = vld [vmem:[%s241 + $0x8] sm:$0xff]
        %v322 = vld [vmem:[%s241 + $0x10] sm:$0xff]
        %v323 = vld [vmem:[%s241 + $0x18] sm:$0xff]
        %v324 = vld [vmem:[%s241 + $0x20] sm:$0xff]
        %v325 = vld [vmem:[%s241 + $0x28] sm:$0xff]
        %v326 = vld [vmem:[%s241 + $0x30] sm:$0xff]
        %v327 = vld [vmem:[%s241 + $0x38] sm:$0xff]
        %v328 = vld [vmem:[%s250] sm:$0xff]
        %v329 = vld [vmem:[%s250 + $0x8] sm:$0xff]
        %v330 = vmax.f32 %v320, %v321
        %v331 = vmax.f32 %v324, %v325
        %v332 = vmax.f32 %v330, %v322
        %v333 = vmax.f32 %v331, %v326
        %v334 = vmax.f32 %v332, %v323
        %v335 = vmax.f32 %v333, %v327
        %v336 = vsub.f32 %v320, %v334
        %v337 = vsub.f32 %v324, %v335
        %v338 = vmul.f32 %v336, 1.442695
        %v339 = vpow.pop %v338
        %v340 = vmul.f32 %v337, 1.442695
        %v341 = vpow.pop %v340
        %v342 = vsub.f32 %v321, %v334
        %v343 = vsub.f32 %v325, %v335
        %v344 = vmul.f32 %v342, 1.442695
        %v345 = vpow.pop %v344
        %v346 = vmul.f32 %v343, 1.442695
        %v347 = vpow.pop %v346
        %v348 = vsub.f32 %v322, %v334
        %v349 = vsub.f32 %v326, %v335
        %v350 = vmul.f32 %v348, 1.442695
        %v351 = vpow.pop %v350
        %v352 = vmul.f32 %v349, 1.442695
        %v353 = vpow.pop %v352
        %v354 = vsub.f32 %v323, %v334
        %v355 = vsub.f32 %v327, %v335
        %v356 = vmul.f32 %v354, 1.442695
        %v357 = vpow.pop %v356
        %v358 = vmul.f32 %v355, 1.442695
        %v359 = vpow.pop %v358
        %v360 = vadd.f32 %v339, %v345
        %v361 = vadd.f32 %v341, %v347
        %v362 = vadd.f32 %v360, %v351
        %v363 = vadd.f32 %v361, %v353
        %v364 = vadd.f32 %v362, %v357
        %v365 = vadd.f32 %v363, %v359
        %v366 = vrcp.pop %v364
        %v367 = vrcp.pop %v365
        %vm368 = vcmp.ge.s32.totalorder %v328, 0
        %vm369 = vcmp.ge.s32.totalorder %v329, 0
        %v370 = vmul.f32 %v339, %v366
        %v371 = vmul.f32 %v341, %v367
        %vm372 = vcmp.eq.s32.totalorder %v328, 0
        %vm373 = vcmp.eq.s32.totalorder %v329, 0
        %v374 = vsel %vm372, %v370, 0.0
        %v375 = vsel %vm373, %v371, 0.0
        %v376 = vsel %vm368, %v370, 0.0
        %v377 = vsel %vm369, %v371, 0.0
        %v378 = vsel %vm372, 1.0, 0.0
        %v379 = vsel %vm373, 1.0, 0.0
        %v380 = vld [vmem:[%s275] sm:$0xff]
        %v381 = vld [vmem:[%s275 + $0x8] sm:$0xff]
        %v382 = vadd.f32 %v380, %v374
        %v383 = vadd.f32 %v381, %v375
        %384 = vst [vmem:[%s275] sm:$0xff] %v382
        %385 = vst [vmem:[%s275 + $0x8] sm:$0xff] %v383
        %v386 = vld [vmem:[%s282] sm:$0xff]
        %v387 = vld [vmem:[%s282 + $0x8] sm:$0xff]
        %v388 = vadd.f32 %v386, %v376
        %v389 = vadd.f32 %v387, %v377
        %390 = vst [vmem:[%s282] sm:$0xff] %v388
        %391 = vst [vmem:[%s282 + $0x8] sm:$0xff] %v389
        %v392 = vld [vmem:[%s289] sm:$0xff]
        %v393 = vld [vmem:[%s289 + $0x8] sm:$0xff]
        %v394 = vadd.f32 %v392, %v378
        %v395 = vadd.f32 %v393, %v379
        %396 = vst [vmem:[%s289] sm:$0xff] %v394
        %397 = vst [vmem:[%s289 + $0x8] sm:$0xff] %v395
        %v398 = vmul.f32 %v345, %v366
        %v399 = vmul.f32 %v347, %v367
        %vm400 = vcmp.eq.s32.totalorder %v328, 1
        %vm401 = vcmp.eq.s32.totalorder %v329, 1
        %v402 = vsel %vm400, %v398, 0.0
        %v403 = vsel %vm401, %v399, 0.0
        %v404 = vsel %vm368, %v398, 0.0
        %v405 = vsel %vm369, %v399, 0.0
        %v406 = vsel %vm400, 1.0, 0.0
        %v407 = vsel %vm401, 1.0, 0.0
        %s408 = scalar_lea.vmem %s275, 16 [#allocation7]
        %v409 = vld [vmem:[%s408] sm:$0xff]
        %v410 = vld [vmem:[%s408 + $0x8] sm:$0xff]
        %v411 = vadd.f32 %v409, %v402
        %v412 = vadd.f32 %v410, %v403
        %413 = vst [vmem:[%s408] sm:$0xff] %v411
        %414 = vst [vmem:[%s408 + $0x8] sm:$0xff] %v412
        %s415 = scalar_lea.vmem %s282, 16 [#allocation8]
        %v416 = vld [vmem:[%s415] sm:$0xff]
        %v417 = vld [vmem:[%s415 + $0x8] sm:$0xff]
        %v418 = vadd.f32 %v416, %v404
        %v419 = vadd.f32 %v417, %v405
        %420 = vst [vmem:[%s415] sm:$0xff] %v418
        %421 = vst [vmem:[%s415 + $0x8] sm:$0xff] %v419
        %s422 = scalar_lea.vmem %s289, 16 [#allocation10]
        %v423 = vld [vmem:[%s422] sm:$0xff]
        %v424 = vld [vmem:[%s422 + $0x8] sm:$0xff]
        %v425 = vadd.f32 %v423, %v406
        %v426 = vadd.f32 %v424, %v407
        %427 = vst [vmem:[%s422] sm:$0xff] %v425
        %428 = vst [vmem:[%s422 + $0x8] sm:$0xff] %v426
        %v429 = vmul.f32 %v351, %v366
        %v430 = vmul.f32 %v353, %v367
        %vm431 = vcmp.eq.s32.totalorder %v328, 2
        %vm432 = vcmp.eq.s32.totalorder %v329, 2
        %v433 = vsel %vm431, %v429, 0.0
        %v434 = vsel %vm432, %v430, 0.0
        %v435 = vsel %vm368, %v429, 0.0
        %v436 = vsel %vm369, %v430, 0.0
        %v437 = vsel %vm431, 1.0, 0.0
        %v438 = vsel %vm432, 1.0, 0.0
        %s439 = scalar_lea.vmem %s275, 32 [#allocation7]
        %v440 = vld [vmem:[%s439] sm:$0xff]
        %v441 = vld [vmem:[%s439 + $0x8] sm:$0xff]
        %v442 = vadd.f32 %v440, %v433
        %v443 = vadd.f32 %v441, %v434
        %444 = vst [vmem:[%s439] sm:$0xff] %v442
        %445 = vst [vmem:[%s439 + $0x8] sm:$0xff] %v443
        %s446 = scalar_lea.vmem %s282, 32 [#allocation8]
        %v447 = vld [vmem:[%s446] sm:$0xff]
        %v448 = vld [vmem:[%s446 + $0x8] sm:$0xff]
        %v449 = vadd.f32 %v447, %v435
        %v450 = vadd.f32 %v448, %v436
        %451 = vst [vmem:[%s446] sm:$0xff] %v449
        %452 = vst [vmem:[%s446 + $0x8] sm:$0xff] %v450
        %s453 = scalar_lea.vmem %s289, 32 [#allocation10]
        %v454 = vld [vmem:[%s453] sm:$0xff]
        %v455 = vld [vmem:[%s453 + $0x8] sm:$0xff]
        %v456 = vadd.f32 %v454, %v437
        %v457 = vadd.f32 %v455, %v438
        %458 = vst [vmem:[%s453] sm:$0xff] %v456
        %459 = vst [vmem:[%s453 + $0x8] sm:$0xff] %v457
        %v460 = vmul.f32 %v357, %v366
        %v461 = vmul.f32 %v359, %v367
        %vm462 = vcmp.eq.s32.totalorder %v328, 3
        %vm463 = vcmp.eq.s32.totalorder %v329, 3
        %v464 = vsel %vm462, %v460, 0.0
        %v465 = vsel %vm463, %v461, 0.0
        %v466 = vsel %vm368, %v460, 0.0
        %v467 = vsel %vm369, %v461, 0.0
        %v468 = vsel %vm462, 1.0, 0.0
        %v469 = vsel %vm463, 1.0, 0.0
        %s470 = scalar_lea.vmem %s275, 48 [#allocation7]
        %v471 = vld [vmem:[%s470] sm:$0xff]
        %v472 = vld [vmem:[%s470 + $0x8] sm:$0xff]
        %v473 = vadd.f32 %v471, %v464
        %v474 = vadd.f32 %v472, %v465
        %475 = vst [vmem:[%s470] sm:$0xff] %v473
        %476 = vst [vmem:[%s470 + $0x8] sm:$0xff] %v474
        %s477 = scalar_lea.vmem %s282, 48 [#allocation8]
        %v478 = vld [vmem:[%s477] sm:$0xff]
        %v479 = vld [vmem:[%s477 + $0x8] sm:$0xff]
        %v480 = vadd.f32 %v478, %v466
        %v481 = vadd.f32 %v479, %v467
        %482 = vst [vmem:[%s477] sm:$0xff] %v480
        %483 = vst [vmem:[%s477 + $0x8] sm:$0xff] %v481
        %s484 = scalar_lea.vmem %s289, 48 [#allocation10]
        %v485 = vld [vmem:[%s484] sm:$0xff]
        %v486 = vld [vmem:[%s484 + $0x8] sm:$0xff]
        %v487 = vadd.f32 %v485, %v468
        %v488 = vadd.f32 %v486, %v469
        %489 = vst [vmem:[%s484] sm:$0xff] %v487
        %490 = vst [vmem:[%s484 + $0x8] sm:$0xff] %v488
        %s491 = sand.u32 %s104, 1
        %s492 = scalar_lea.sflag [#allocation4], %s491
        %s493 = sand.u32 %s104, 1
        %s494 = smul.addr %s493, 64
        %s495 = scalar_lea.vmem [#allocation7], %s494
        %s496 = sand.u32 %s28, 1
        %s497 = scalar_lea.sflag [#allocation9], %s496
        %s498 = sand.u32 %s130, 1
        %s499 = smul.addr %s498, 64
        %s500 = scalar_lea.vmem [#allocation8], %s499
        %s501 = sand.u32 %s28, 1
        %s502 = scalar_lea.sflag [#allocation9], %s501
        %s503 = sand.u32 %s156, 1
        %s504 = smul.addr %s503, 64
        %s505 = scalar_lea.vmem [#allocation10], %s504
        // Predicated region
        $region41: #{tpu_custom_call.1} parent=27 // pred_check
          %p506 = pneg %p114
        $region42: #{tpu_custom_call.1} parent=27 // pred_check_branch
          %508 = sbr.rel (%p506) target = $region44
        $region43: #{tpu_custom_call.1} parent=27 // pred_region
          %s510 = ssub.s32 1024, 1024
          %511 = vsyncadd %s492, %s510
          %s512 = smul.addr %s32, 8
          %s513 = smul.addr %s512, 128
          %s514 = scalar_lea.hbm %s2, %s513
          %s515 = sshll.u32 %s495, 4
          %s516 = int_to_ptr.vmem [resolvable:$true] %s515
          %521 = dma.vmem_to_hbm [thread:$0]  %s516, 1024, %s514, %s492, 128, 128, 8
        $region44: #{tpu_custom_call.1} parent=27 // pred_fallthru
          _
        // Predicated region
        $region45: #{tpu_custom_call.1} parent=27 // pred_check
          %p522 = pneg %p140
        $region46: #{tpu_custom_call.1} parent=27 // pred_check_branch
          %524 = sbr.rel (%p522) target = $region48
        $region47: #{tpu_custom_call.1} parent=27 // pred_region
          %s526 = ssub.s32 1024, 1024
          %527 = vsyncadd %s497, %s526
          %s528 = smul.addr %s32, 8
          %s529 = smul.addr %s528, 128
          %s530 = scalar_lea.hbm %s3, %s529
          %s531 = sshll.u32 %s500, 4
          %s532 = int_to_ptr.vmem [resolvable:$true] %s531
          %537 = dma.vmem_to_hbm [thread:$0]  %s532, 1024, %s530, %s497, 128, 128, 8
        $region48: #{tpu_custom_call.1} parent=27 // pred_fallthru
          _
        // Predicated region
        $region49: #{tpu_custom_call.1} parent=27 // pred_check
          %p538 = pneg %p166
        $region50: #{tpu_custom_call.1} parent=27 // pred_check_branch
          %540 = sbr.rel (%p538) target = $region52
        $region51: #{tpu_custom_call.1} parent=27 // pred_region
          %s542 = ssub.s32 1024, 1024
          %543 = vsyncadd %s502, %s542
          %s544 = smul.addr %s32, 8
          %s545 = smul.addr %s544, 128
          %s546 = scalar_lea.hbm %s4, %s545
          %s547 = sshll.u32 %s505, 4
          %s548 = int_to_ptr.vmem [resolvable:$true] %s547
          %553 = dma.vmem_to_hbm [thread:$0]  %s548, 1024, %s546, %s502, 128, 128, 8
        $region52: #{tpu_custom_call.1} parent=27 // pred_fallthru
          _
      $region28: #{tpu_custom_call.1} parent=5 // pred_fallthru
        _
      %p554 = scmp.le.s32.totalorder 2, %s23
      // Predicated region
      $region53: #{tpu_custom_call.1} parent=5 // pred_check
        %p555 = pneg %p554
      $region54: #{tpu_custom_call.1} parent=5 // pred_check_branch
        %557 = sbr.rel (%p555) target = $region56
      $region55: #{tpu_custom_call.1} parent=5 // pred_region
        %s558 = ssub.s32 %s23, 2
        // Predicated region
        $region57: #{tpu_custom_call.1} parent=55 // pred_check
          %p559 = pneg %p120
        $region58: #{tpu_custom_call.1} parent=55 // pred_check_branch
          %561 = sbr.rel (%p559) target = $region60
        $region59: #{tpu_custom_call.1} parent=55 // pred_region
          %s562 = sand.u32 %s105, 1
          %s563 = scalar_lea.sflag [#allocation4], %s562
          %s564 = sand.u32 %s105, 1
          %s565 = smul.addr %s564, 64
          %s566 = scalar_lea.vmem [#allocation7], %s565
          %567 = dma.done %s563, 1024
        $region60: #{tpu_custom_call.1} parent=55 // pred_fallthru
          _
        // Predicated region
        $region61: #{tpu_custom_call.1} parent=55 // pred_check
          %p568 = pneg %p146
        $region62: #{tpu_custom_call.1} parent=55 // pred_check_branch
          %570 = sbr.rel (%p568) target = $region64
        $region63: #{tpu_custom_call.1} parent=55 // pred_region
          %s571 = sand.u32 %s29, 1
          %s572 = scalar_lea.sflag [#allocation9], %s571
          %s573 = sand.u32 %s131, 1
          %s574 = smul.addr %s573, 64
          %s575 = scalar_lea.vmem [#allocation8], %s574
          %576 = dma.done %s572, 1024
        $region64: #{tpu_custom_call.1} parent=55 // pred_fallthru
          _
        // Predicated region
        $region65: #{tpu_custom_call.1} parent=55 // pred_check
          %p577 = pneg %p172
        $region66: #{tpu_custom_call.1} parent=55 // pred_check_branch
          %579 = sbr.rel (%p577) target = $region68
        $region67: #{tpu_custom_call.1} parent=55 // pred_region
          %s580 = sand.u32 %s29, 1
          %s581 = scalar_lea.sflag [#allocation9], %s580
          %s582 = sand.u32 %s157, 1
          %s583 = smul.addr %s582, 64
          %s584 = scalar_lea.vmem [#allocation10], %s583
          %585 = dma.done %s581, 1024
        $region68: #{tpu_custom_call.1} parent=55 // pred_fallthru
          _
      $region56: #{tpu_custom_call.1} parent=5 // pred_fallthru
        _
    $region6: #{tpu_custom_call.1} parent=1 // loop_footer
      %s27 = sadd.s32 1, %s23
    $region7: #{tpu_custom_call.1} parent=1 // loop_footer_branch
      %22 = sbr.rel target = $region3
    $region8: #{tpu_custom_call.1} parent=1 // loop_exit
      _
    %586 = vsyncpa [#allocation3], 1
    %s587 = scalar_lea.sflag [#allocation3], 1
    %588 = vsyncpa %s587, 1
    %589 = vsyncpa [#allocation6], 1
    %s590 = scalar_lea.sflag [#allocation6], 1
    %591 = vsyncpa %s590, 1
    %592 = vsyncpa [#allocation4], 1
    %s593 = scalar_lea.sflag [#allocation4], 1
    %594 = vsyncpa %s593, 1
    %595 = vsyncpa [#allocation9], 1
    %s596 = scalar_lea.sflag [#allocation9], 1
    %597 = vsyncpa %s596, 1

</llo_original>
